<compile_context>
chip_gen: v6e
topology: v6e:2x2x1
jax: 0.10.0
libtpu: 0.0.40
codegen_flags: <defaults>
</compile_context>

<pallas_src>
import math
from functools import partial

import numpy as np
import jax
import jax.numpy as jnp
from jax.experimental import pallas as pl
from jax.experimental.pallas import tpu as pltpu

_MiB = 1024 * 1024


def make_positional_encoding(d_model: int, max_len: int = 5000) -> jnp.ndarray:
    """Replicates PositionalEncoding.__init__ buffer: shape (max_len, 1, d_model)."""
    position = jnp.arange(0, max_len, dtype=jnp.float32)[:, None]          # (max_len, 1)
    div_term = jnp.exp(
        jnp.arange(0, d_model, 2, dtype=jnp.float32) * (-np.log(10000.0) / d_model)
    )                                                                       # (ceil(d/2),)
    pe = jnp.zeros((max_len, d_model), dtype=jnp.float32)
    pe = pe.at[:, 0::2].set(jnp.sin(position * div_term))
    # cos half uses only floor(d/2) columns -> also works for odd d_model
    # (identical to the PyTorch recipe for even d_model).
    pe = pe.at[:, 1::2].set(jnp.cos(position * div_term[: d_model // 2]))
    return pe[:, None, :]                                                   # (max_len, 1, d_model)


# ----------------------------------------------------------------------------
# Kernel (VPU elementwise add; memory-bound).  In-kernel pe replication.
# ----------------------------------------------------------------------------

def _replicate_lanes(v, reps: int):
    """Replicate `v` `reps` times along the lane (last) axis via log-doubling concats."""
    if reps == 1:
        return v
    out, built = v, 1
    while built * 2 <= reps:
        out = jnp.concatenate([out, out], axis=-1)
        built *= 2
    if built < reps:
        out = jnp.concatenate([out, _replicate_lanes(v, reps - built)], axis=-1)
    return out


def _pe_add_kernel(x_ref, pe_ref, o_ref, *, g: int, batch: int, d_model: int):
    # x_ref/o_ref: (ts, g*batch*d_model)   pe_ref: (ts, g*d_model)
    pe = pe_ref[...]
    if batch == 1:
        pe_wide = pe
    elif g == 1:
        pe_wide = _replicate_lanes(pe, batch)
    else:
        pe_wide = jnp.concatenate(
            [_replicate_lanes(pe[:, j * d_model:(j + 1) * d_model], batch)
             for j in range(g)],
            axis=-1,
        )
    o_ref[...] = x_ref[...] + pe_wide


# ----------------------------------------------------------------------------
# Tiling helpers.
# ----------------------------------------------------------------------------

def _tpu_vmem_capacity() -> int:
    try:
        cap = int(pltpu.get_tpu_info().vmem_capacity_bytes)
        if cap > 0:
            return cap
    except Exception:
        pass
    return 64 * _MiB  # conservative fallback (v7x-safe)


def _choose_fold(S: int, W: int) -> int:
    """Smallest g with S % g == 0 and (g*W) % 128 == 0 (lane-dense stores); else 1."""
    if W % 128 == 0 or S <= 1:
        return 1
    g0 = 128 // math.gcd(W, 128)
    g = g0
    while g <= min(S, 32):          # cap so in-kernel replication stays cheap
        if S % g == 0:
            return g
        g += g0
    return 1


def _pick_seq_tile(S_rows: int, row_bytes: int, pe_row_bytes: int, *,
                   vmem_budget: int, max_rows: int, min_steps: int) -> int:
    """Largest multiple-of-8 row tile fitting the VMEM budget (double-buffered)."""
    if S_rows <= 8:
        return S_rows
    per_row = 2 * (2 * row_bytes + pe_row_bytes)   # 2x-buffered x-in, out, pe tiles
    ts = (vmem_budget // per_row // 8) * 8
    ts = int(min(max(ts, 8), max_rows))
    if S_rows >= 8 * min_steps:
        ts = min(ts, max(8, (S_rows // min_steps // 8) * 8))
    if ts >= S_rows:
        return S_rows
    return ts


# ----------------------------------------------------------------------------
# Forward: x + pe[:S]
# ----------------------------------------------------------------------------

@partial(jax.jit, static_argnames=("donate_x",))
def positional_encoding_forward(x: jnp.ndarray, pe: jnp.ndarray, *,
                                donate_x: bool = False) -> jnp.ndarray:
    """Forward pass: x + pe[:x.shape[0], :].  x: (S, B, D), pe: (max_len, 1, D)."""
    S, B, D = x.shape
    W = B * D
    itemsize = jnp.dtype(x.dtype).itemsize

    # pe prep is tiny (S*D elems): slice + one-time cast to x.dtype (halves pe
    # DMA for bf16 activations; rounds pe before the add -- fine for PE).
    pe_slice = pe[:S, 0, :].astype(x.dtype)                                 # (S, D)

    # Always lane-flatten x; fold sequence rows into lanes when W isn't
    # 128-dense so the output stores are full-width vst instead of vst.msk.
    g = _choose_fold(S, W)
    S_rows = S // g
    Wg = g * W
    x_in = x.reshape(S_rows, Wg)                  # free contiguous reshape
    pe_in = pe_slice.reshape(S_rows, g * D)       # free contiguous reshape (tiny)

    # Generation-aware VMEM sizing.
    cap = _tpu_vmem_capacity()
    if cap >= 100 * _MiB:     # v5e / v6e: 128 MiB physical, single TensorCore
        budget, limit, max_rows, min_steps, multi_tc = 96 * _MiB, 110 * _MiB, 1024, 2, False
    else:                     # v7x: 64 MiB per TC, 2 TensorCores
        budget, limit, max_rows, min_steps, multi_tc = 40 * _MiB, 52 * _MiB, 512, 4, True

    ts = _pick_seq_tile(S_rows, Wg * itemsize, g * D * itemsize,
                        vmem_budget=budget, max_rows=max_rows, min_steps=min_steps)
    num_steps = -(-S_rows // ts)
    if multi_tc and num_steps > 1 and num_steps % 2 == 1:
        # Even step count so the "parallel" 1-D grid splits evenly across 2 TCs.
        ts2 = ((-(-S_rows // (num_steps + 1)) + 7) // 8) * 8
        if ts2 >= 8 and (-(-S_rows // ts2)) % 2 == 0:
            ts = ts2
            num_steps = -(-S_rows // ts)

    kernel = partial(_pe_add_kernel, g=g, batch=B, d_model=D)

    # Advisory cost: read x, write out, read pe once; one add per element.
    cost = pl.CostEstimate(
        flops=int(S) * int(W),
        transcendentals=0,
        bytes_accessed=int((2 * S * W + S * D) * itemsize),
    )

    extra = {"input_output_aliases": {0: 0}} if donate_x else {}

    out = pl.pallas_call(
        kernel,
        out_shape=jax.ShapeDtypeStruct((S_rows, Wg), x.dtype),
        grid_spec=pltpu.PrefetchScalarGridSpec(
            num_scalar_prefetch=0,
            grid=(num_steps,),                     # partial last block handled by Pallas
            in_specs=[
                pl.BlockSpec((ts, Wg), lambda i: (i, 0)),
                pl.BlockSpec((ts, g * D), lambda i: (i, 0)),
            ],
            out_specs=pl.BlockSpec((ts, Wg), lambda i: (i, 0)),
        ),
        compiler_params=pltpu.CompilerParams(
            dimension_semantics=("parallel",),
            vmem_limit_bytes=limit,
        ),
        cost_estimate=cost,
        **extra,
    )(x_in, pe_in)

    return out.reshape(S, B, D)


if __name__ == "__main__":
    key = jax.random.PRNGKey(0)
    k1, k2 = jax.random.split(key)

    # Case 1: small shape consistent with the module (seq=8, batch=2, d_model=32).
    # W = 64 -> folded path (g=2, lane-dense 128-wide stores).
    S, B, D = 8, 2, 32
    pe = make_positional_encoding(D, max_len=64)
    x = jax.random.normal(k1, (S, B, D), dtype=jnp.float32)
    out = jax.block_until_ready(positional_encoding_forward(x, pe))
    ref = x + pe[:S, :]
    np.testing.assert_allclose(np.asarray(out), np.asarray(ref), rtol=1e-6, atol=1e-6)

    # Case 2: lane-dense path (D % 128 == 0) with in-kernel batch replication.
    S2, B2, D2 = 16, 2, 128
    pe2 = make_positional_encoding(D2, max_len=64)
    x2 = jax.random.normal(k2, (S2, B2, D2), dtype=jnp.float32)
    out2 = jax.block_until_ready(positional_encoding_forward(x2, pe2))
    ref2 = x2 + pe2[:S2, :]
    np.testing.assert_allclose(np.asarray(out2), np.asarray(ref2), rtol=1e-6, atol=1e-6)

    print("KERNEL_OK")
</pallas_src>

<mosaic_0001>
module attributes {stable_mosaic.version = 11 : i64} {
  func.func @_pe_add_kernel(%arg0: i32, %arg1: memref<4x128xf32, #tpu.memory_space<vmem>>, %arg2: memref<4x64xf32, #tpu.memory_space<vmem>>, %arg3: memref<4x128xf32, #tpu.memory_space<vmem>>) attributes {dimension_semantics = [#tpu.dimension_semantics<parallel>], iteration_bounds = array<i64: 1>, scalar_prefetch = 0 : i64, scratch_operands = 0 : i64, tpu.core_type = #tpu.core_type<tc>, window_params = [{transform_indices = @transform_0, window_bounds = array<i64: 4, 128>}, {transform_indices = @transform_1, window_bounds = array<i64: 4, 64>}, {transform_indices = @transform_2, window_bounds = array<i64: 4, 128>}]} {
    %c0 = arith.constant 0 : index
    %c0_0 = arith.constant 0 : index
    %0 = vector.load %arg2[%c0, %c0_0] : memref<4x64xf32, #tpu.memory_space<vmem>>, vector<4x64xf32>
    %1 = vector.extract_strided_slice %0 {offsets = [0, 0], sizes = [4, 32], strides = [1, 1]} : vector<4x64xf32> to vector<4x32xf32>
    %2 = tpu.concatenate %1, %1 in 1 : vector<4x32xf32>, vector<4x32xf32> -> vector<4x64xf32>
    %3 = vector.extract_strided_slice %0 {offsets = [0, 32], sizes = [4, 32], strides = [1, 1]} : vector<4x64xf32> to vector<4x32xf32>
    %4 = tpu.concatenate %3, %3 in 1 : vector<4x32xf32>, vector<4x32xf32> -> vector<4x64xf32>
    %5 = tpu.concatenate %2, %4 in 1 : vector<4x64xf32>, vector<4x64xf32> -> vector<4x128xf32>
    %c0_1 = arith.constant 0 : index
    %c0_2 = arith.constant 0 : index
    %6 = vector.load %arg1[%c0_1, %c0_2] : memref<4x128xf32, #tpu.memory_space<vmem>>, vector<4x128xf32>
    %7 = arith.addf %6, %5 : vector<4x128xf32>
    %c0_3 = arith.constant 0 : index
    %c0_4 = arith.constant 0 : index
    %8 = vector.load %arg3[%c0_3, %c0_4] : memref<4x128xf32, #tpu.memory_space<vmem>>, vector<4x128xf32>
    tpu.vector_store %arg3[%c0_3, %c0_4], %7 {strides = array<i32>} : memref<4x128xf32, #tpu.memory_space<vmem>>, vector<4x128xf32>,
    return
  }
  func.func @transform_0(%arg0: i32) -> (i32, i32) {
    %c0_i32 = arith.constant 0 : i32
    %c0_i32_0 = arith.constant 0 : i32
    return %arg0, %c0_i32 : i32, i32
  }
  func.func @transform_1(%arg0: i32) -> (i32, i32) {
    %c0_i32 = arith.constant 0 : i32
    %c0_i32_0 = arith.constant 0 : i32
    return %arg0, %c0_i32 : i32, i32
  }
  func.func @transform_2(%arg0: i32) -> (i32, i32) {
    %c0_i32 = arith.constant 0 : i32
    %c0_i32_0 = arith.constant 0 : i32
    return %arg0, %c0_i32 : i32, i32
  }
}

</mosaic_0001>

<llo_original>
// kernel: squeeze.1
$region0: #{squeeze.1}
  %s0 = inlined_call_operand.vmem [shape: f32[8,1,32], index: 0, kind: input, shape index: {}]
  %s1 = inlined_call_operand.vmem [shape: f32[4,64], index: 1, kind: output, shape index: {}]
  $region1: #{squeeze.1} parent=0
    #allocation0 [shape = 'u8[4096]{0}', space=vmem, size = 0x1000, scoped, tag = 'scoped mem for output reshape']
    %v2 = vld [vmem:[%s0] ss:$2 sm:$0xf]
    %vm3 = vcmask 261120
    %4 = vst.msk [vmem:[#allocation0] sm:$0xf] %vm3, %v2
    %s5 = scalar_lea.vmem %s0, 1
    %v6 = vld [vmem:[%s5] ss:$2 sm:$0xf]
    %7 = vrot.lane.b32.xlu0 %v6, 32
    %v8 = vpop.permute.xlu0 %7
    %vm9 = vcmask 523520
    %10 = vst.msk [vmem:[#allocation0] sm:$0xf] %vm9, %v8
    %s12 = sshll.u32 1, 4
    %s13 = ssub.s32 %s12, 1
    %v15 = vld [vmem:[#allocation0] sm:%s13]
    %s16 = sshll.u32 1, 4
    %s17 = ssub.s32 %s16, 1
    %18 = vst [vmem:[%s1] sm:%s17] %v15

// kernel: positional_encoding_forward.1
$region0: #{positional_encoding_forward.1}
  #allocation0 [shape = 'u32[]', space=smem, size = 0x4, offset = 0x4, fixed_abs, tag = 'smem constant byte address 0x4 - core index']
  #allocation1 [shape = 'u32[144,128]{1,0:T(1,128)}', space=vmem, size = 0x12000, scoped, tag = 'internal scratch']
  %s0 = inlined_call_operand.vmem [shape: f32[4,128], index: 0, kind: input, shape index: {}]
  %s1 = inlined_call_operand.vmem [shape: f32[4,64], index: 1, kind: input, shape index: {}]
  %s2 = inlined_call_operand.vmem [shape: f32[4,128], index: 2, kind: output, shape index: {}]
  %s3 = sld [smem:[#allocation0]]
  $region18: #{positional_encoding_forward.1} parent=0
    _
  %s5 = ssub.s32 1, %s3
  %s6 = scalar_select 0, %s5, %s3
  // Predicated region
  $region2: #{positional_encoding_forward.1} parent=0 // pred_check
    _
  $region3: #{positional_encoding_forward.1} parent=0 // pred_check_branch
    %8 = sbr.rel (0) target = $region5
  $region4: #{positional_encoding_forward.1} parent=0 // pred_region
    _
  $region5: #{positional_encoding_forward.1} parent=0 // pred_fallthru
    _
  // Predicated region
  $region6: #{positional_encoding_forward.1} parent=0 // pred_check
    _
  $region7: #{positional_encoding_forward.1} parent=0 // pred_check_branch
    %10 = sbr.rel (0) target = $region9
  $region8: #{positional_encoding_forward.1} parent=0 // pred_region
    _
  $region9: #{positional_encoding_forward.1} parent=0 // pred_fallthru
    _
  %v11 = vld [vmem:[%s1] sm:$0xf]
  %13 = vrot.lane.b32.xlu0 %v11, 32
  %v14 = vpop.permute.xlu0 %13
  %vm16 = vcmask 261120
  %v17 = vsel %vm16, %v11, %v14
  %18 = vrot.lane.b32.xlu0 %v11, 96
  %v19 = vpop.permute.xlu0 %18
  %v21 = vsel %vm16, %v19, %v11
  %23 = vrot.lane.b32.xlu0 %v21, 64
  %v24 = vpop.permute.xlu0 %23
  %vm26 = vcmask 523264
  %v27 = vsel %vm26, %v17, %v24
  %v28 = vld [vmem:[%s0] sm:$0xf]
  %v29 = vadd.f32 %v28, %v27
  %30 = vst [vmem:[%s2] sm:$0xf] %v29
  // Predicated region
  $region10: #{positional_encoding_forward.1} parent=0 // pred_check
    _
  $region11: #{positional_encoding_forward.1} parent=0 // pred_check_branch
    %32 = sbr.rel (0) target = $region13
  $region12: #{positional_encoding_forward.1} parent=0 // pred_region
    _
  $region13: #{positional_encoding_forward.1} parent=0 // pred_fallthru
    _
  // Predicated region
  $region14: #{positional_encoding_forward.1} parent=0 // pred_check
    _
  $region15: #{positional_encoding_forward.1} parent=0 // pred_check_branch
    %34 = sbr.rel (0) target = $region17
  $region16: #{positional_encoding_forward.1} parent=0 // pred_region
    _
  $region17: #{positional_encoding_forward.1} parent=0 // pred_fallthru
    _

</llo_original>
